<compile_context>
chip_gen: v6e
topology: v6e:2x2x1
jax: 0.10.0
libtpu: 0.0.40
codegen_flags: <defaults>
</compile_context>

<pallas_src>
from functools import partial

import jax
import jax.numpy as jnp
from jax import lax
from jax.experimental import pallas as pl
from jax.experimental.pallas import tpu as pltpu


def _ceil_to(x, m):
    return (x + m - 1) // m * m


def _fused_seq_encoder_kernel(xr_ref, kc_ref, o_ref, *, H2, Q):
    # xr_ref: (B_TILE, Hq, C)     VMEM  folded input view: xr[b, p, r*W+w] = x[b, S2*p+r, w]
    # kc_ref: (Q, C)              VMEM  folded composed kernel (resident across the grid)
    # o_ref : (B_TILE, H2_pad)    VMEM  lane-dense output tile
    kc = kc_ref[...]                                   # (Q, C)

    # out[b, m] = sum_q sum_c xr[b, m+q, c] * kc[q, c]
    # Per-tap multiply + lane-reduce into a SMALL 2-D accumulator (no 3-D carry -> no
    # vreg spills; the lane reduce runs on the XLU slot).  Q is tiny (5 for the default
    # config), so the static Python loop is fully unrolled at trace time.
    acc = jnp.sum(xr_ref[:, 0:H2, :] * kc[0], axis=-1)             # (B_TILE, H2)
    for q in range(1, Q):
        acc = acc + jnp.sum(xr_ref[:, q:q + H2, :] * kc[q], axis=-1)

    B, H2_pad = o_ref.shape
    if H2_pad > H2:
        # Zero the lane-pad tail once (tiny masked store); bulk result store below stays
        # lane-dense.  (Replaces the previous per-step jnp.concatenate.)
        o_ref[:, H2:] = jnp.zeros((B, H2_pad - H2), o_ref.dtype)
    o_ref[:, :H2] = acc.astype(o_ref.dtype)


def sequence_encoder_forward(x_nchw, k1, k2, *, stride1=1, stride2=4, batch_tile=None):
    """Pallas forward of SequenceEncoder (default config). Returns (N, H2) float32."""
    N, C_in, H, W = x_nchw.shape
    assert C_in == 1, "default config has a single input channel"
    KH1, KW1 = k1.shape
    assert KW1 == W, "conv1 kernel spans the full width (default config)"
    assert stride1 == 1, "default config uses stride 1 for conv1"
    KH2 = k2.shape[0]
    S2 = stride2

    H1 = H - KH1 + 1                          # conv1 output height (width -> 1)
    H2 = (H1 - KH2) // S2 + 1                 # conv2 / final output height
    assert H2 >= 1, f"degenerate shape: H={H} too small for kernels ({KH1},{KH2})"
    Kc = KH1 + KH2 - 1                        # fused kernel height
    Q = (Kc + S2 - 1) // S2                   # folded taps -> contiguous slices in-kernel
    Hq = H2 + Q - 1                           # folded rows needed per sample
    C = S2 * W                                # folded lane width (132 for default config)
    H2_pad = _ceil_to(H2, 128)                # lane-dense output width

    # --- compose the two convs (exact: no bias / nonlinearity between them) -----------
    k1 = k1.astype(jnp.float32)
    k2 = k2.astype(jnp.float32)
    kc = jnp.zeros((Kc, W), jnp.float32)
    for t in range(KH2):                      # tiny trace-time loop over the conv2 taps
        kc = kc.at[t:t + KH1, :].add(k2[t] * k1)
    kc = jnp.pad(kc, ((0, Q * S2 - Kc), (0, 0)))     # zero taps beyond Kc -> safe padding
    kc_folded = kc.reshape(Q, C)              # kc_folded[q, r*W + w] = kc[S2*q + r, w]

    # --- fold x so the strided window walk becomes contiguous slices ------------------
    x = x_nchw[:, 0, :, :].astype(jnp.float32)        # (N, H, W)
    H_use = Hq * S2
    if H != H_use:
        # NOTE: this materializes one HBM copy of x; the default config (H == Hq*S2,
        # f32 input) takes the free-reshape path below.
        if H >= H_use:
            x = x[:, :H_use, :]
        else:
            # padded rows are only ever multiplied by the zero-padded kc taps
            x = jnp.pad(x, ((0, 0), (0, H_use - H), (0, 0)))
    xr = x.reshape(N, Hq, C)                  # free view: xr[b, p, r*W + w] = x[b, S2*p+r, w]

    # --- batch tiling ------------------------------------------------------------------
    if batch_tile is None:
        # 16 keeps double-buffered input blocks well inside scoped VMEM on every
        # generation (v5e 16 MiB default, v7x 64 MiB physical) and gives the parallel
        # batch axis >= 2 grid steps for v7x megacore on realistic batch sizes.
        batch_tile = N if N <= 16 else 16
    n_tiles = (N + batch_tile - 1) // batch_tile
    N_pad = n_tiles * batch_tile
    if N_pad > N:
        xr = jnp.pad(xr, ((0, N_pad - N), (0, 0), (0, 0)))

    # --- VMEM budget (lane-padded: C pads to a multiple of 128 in VMEM tiling) ---------
    C_lanes = _ceil_to(C, 128)
    in_block = batch_tile * _ceil_to(Hq, 8) * C_lanes * 4
    kc_block = _ceil_to(Q, 8) * C_lanes * 4
    out_block = _ceil_to(batch_tile, 8) * H2_pad * 4
    needed = 2 * (in_block + kc_block + out_block)        # double-buffered pipeline
    vmem_limit = int(min(max(needed + (4 << 20), 16 << 20), 48 << 20))

    kern = partial(_fused_seq_encoder_kernel, H2=H2, Q=Q)

    out = pl.pallas_call(
        kern,
        grid=(n_tiles,),
        in_specs=[
            pl.BlockSpec((batch_tile, Hq, C), lambda b: (b, 0, 0)),
            pl.BlockSpec((Q, C), lambda b: (0, 0)),   # kernel stays resident across grid
        ],
        out_specs=pl.BlockSpec((batch_tile, H2_pad), lambda b: (b, 0)),
        out_shape=jax.ShapeDtypeStruct((N_pad, H2_pad), jnp.float32),
        compiler_params=pltpu.CompilerParams(
            dimension_semantics=("parallel",),        # batch grid shards across TCs
            vmem_limit_bytes=vmem_limit),
    )(xr, kc_folded)

    return out[:N, :H2]                       # == .flatten(1) in the reference


def reference_forward(x_nchw, k1, k2, stride1, stride2):
    """Pure-JAX reference matching PyTorch Conv2d (cross-correlation, VALID)."""
    w1 = k1[None, None, :, :]                 # (O=1, I=1, KH1, KW1)
    y = lax.conv_general_dilated(
        x_nchw, w1, window_strides=(stride1, stride1), padding="VALID",
        dimension_numbers=("NCHW", "OIHW", "NCHW"))
    w2 = k2[None, None, :, None]              # (1, 1, KH2, 1)
    y = lax.conv_general_dilated(
        y, w2, window_strides=(stride2, stride2), padding="VALID",
        dimension_numbers=("NCHW", "OIHW", "NCHW"))
    return y.reshape(y.shape[0], -1)


if __name__ == "__main__":
    key = jax.random.PRNGKey(0)
    k_x, k_w1, k_w2 = jax.random.split(key, 3)

    # Small shapes consistent with the module (height shrunk from 1500 to 128).
    N, H, W = 2, 128, 33
    KH1, KW1 = 3, 33       # conv1 kernel
    KH2 = 16               # conv2 kernel height (width = 1)
    S1, S2 = 1, 4          # strides

    x = jax.random.normal(k_x, (N, 1, H, W), dtype=jnp.float32)
    conv1_w = jax.random.normal(k_w1, (KH1, KW1), dtype=jnp.float32) * 0.1
    conv2_w = jax.random.normal(k_w2, (KH2,), dtype=jnp.float32) * 0.1

    out = sequence_encoder_forward(x, conv1_w, conv2_w, stride1=S1, stride2=S2)
    out = jax.block_until_ready(out)

    ref = reference_forward(x, conv1_w, conv2_w, S1, S2)
    assert out.shape == ref.shape, (out.shape, ref.shape)
    if not jnp.allclose(out, ref, rtol=1e-3, atol=1e-3):
        max_err = float(jnp.max(jnp.abs(out - ref)))
        raise SystemExit(f"mismatch vs reference, max abs err = {max_err}")

    print("KERNEL_OK")
</pallas_src>

<mosaic_0001>
module attributes {stable_mosaic.version = 11 : i64} {
  func.func @_fused_seq_encoder_kernel(%arg0: i32, %arg1: memref<2x32x132xf32, #tpu.memory_space<vmem>>, %arg2: memref<5x132xf32, #tpu.memory_space<vmem>>, %arg3: memref<2x128xf32, #tpu.memory_space<vmem>>) attributes {dimension_semantics = [#tpu.dimension_semantics<parallel>], iteration_bounds = array<i64: 1>, scalar_prefetch = 0 : i64, scratch_operands = 0 : i64, tpu.core_type = #tpu.core_type<tc>, window_params = [{transform_indices = @transform_0, window_bounds = array<i64: 2, 32, 132>}, {pipeline_mode = #tpu.pipeline_mode<synchronous>, transform_indices = @transform_1, window_bounds = array<i64: 5, 132>}, {transform_indices = @transform_2, window_bounds = array<i64: 2, 128>}]} {
    %c0 = arith.constant 0 : index
    %c0_0 = arith.constant 0 : index
    %0 = vector.load %arg2[%c0, %c0_0] : memref<5x132xf32, #tpu.memory_space<vmem>>, vector<5x132xf32>
    %c0_1 = arith.constant 0 : index
    %c0_2 = arith.constant 0 : index
    %c0_3 = arith.constant 0 : index
    %1 = vector.load %arg1[%c0_1, %c0_2, %c0_3] : memref<2x32x132xf32, #tpu.memory_space<vmem>>, vector<2x28x132xf32>
    %2 = vector.extract_strided_slice %0 {offsets = [0, 0], sizes = [1, 132], strides = [1, 1]} : vector<5x132xf32> to vector<1x132xf32>
    %3 = vector.shape_cast %2 : vector<1x132xf32> to vector<132xf32>
    %4 = vector.shape_cast %3 : vector<132xf32> to vector<1x1x132xf32>
    %5 = vector.broadcast %4 : vector<1x1x132xf32> to vector<2x28x132xf32>
    %6 = arith.mulf %1, %5 : vector<2x28x132xf32>
    %cst = arith.constant dense<0.000000e+00> : vector<2x28xf32>
    %7 = vector.multi_reduction <add>, %6, %cst [2] : vector<2x28x132xf32> to vector<2x28xf32>
    %c0_4 = arith.constant 0 : index
    %c1 = arith.constant 1 : index
    %c0_5 = arith.constant 0 : index
    %8 = vector.load %arg1[%c0_4, %c1, %c0_5] : memref<2x32x132xf32, #tpu.memory_space<vmem>>, vector<2x28x132xf32>
    %9 = vector.extract_strided_slice %0 {offsets = [1, 0], sizes = [1, 132], strides = [1, 1]} : vector<5x132xf32> to vector<1x132xf32>
    %10 = vector.shape_cast %9 : vector<1x132xf32> to vector<132xf32>
    %11 = vector.shape_cast %10 : vector<132xf32> to vector<1x1x132xf32>
    %12 = vector.broadcast %11 : vector<1x1x132xf32> to vector<2x28x132xf32>
    %13 = arith.mulf %8, %12 : vector<2x28x132xf32>
    %cst_6 = arith.constant dense<0.000000e+00> : vector<2x28xf32>
    %14 = vector.multi_reduction <add>, %13, %cst_6 [2] : vector<2x28x132xf32> to vector<2x28xf32>
    %15 = arith.addf %7, %14 : vector<2x28xf32>
    %c0_7 = arith.constant 0 : index
    %c2 = arith.constant 2 : index
    %c0_8 = arith.constant 0 : index
    %16 = vector.load %arg1[%c0_7, %c2, %c0_8] : memref<2x32x132xf32, #tpu.memory_space<vmem>>, vector<2x28x132xf32>
    %17 = vector.extract_strided_slice %0 {offsets = [2, 0], sizes = [1, 132], strides = [1, 1]} : vector<5x132xf32> to vector<1x132xf32>
    %18 = vector.shape_cast %17 : vector<1x132xf32> to vector<132xf32>
    %19 = vector.shape_cast %18 : vector<132xf32> to vector<1x1x132xf32>
    %20 = vector.broadcast %19 : vector<1x1x132xf32> to vector<2x28x132xf32>
    %21 = arith.mulf %16, %20 : vector<2x28x132xf32>
    %cst_9 = arith.constant dense<0.000000e+00> : vector<2x28xf32>
    %22 = vector.multi_reduction <add>, %21, %cst_9 [2] : vector<2x28x132xf32> to vector<2x28xf32>
    %23 = arith.addf %15, %22 : vector<2x28xf32>
    %c0_10 = arith.constant 0 : index
    %c3 = arith.constant 3 : index
    %c0_11 = arith.constant 0 : index
    %24 = vector.load %arg1[%c0_10, %c3, %c0_11] : memref<2x32x132xf32, #tpu.memory_space<vmem>>, vector<2x28x132xf32>
    %25 = vector.extract_strided_slice %0 {offsets = [3, 0], sizes = [1, 132], strides = [1, 1]} : vector<5x132xf32> to vector<1x132xf32>
    %26 = vector.shape_cast %25 : vector<1x132xf32> to vector<132xf32>
    %27 = vector.shape_cast %26 : vector<132xf32> to vector<1x1x132xf32>
    %28 = vector.broadcast %27 : vector<1x1x132xf32> to vector<2x28x132xf32>
    %29 = arith.mulf %24, %28 : vector<2x28x132xf32>
    %cst_12 = arith.constant dense<0.000000e+00> : vector<2x28xf32>
    %30 = vector.multi_reduction <add>, %29, %cst_12 [2] : vector<2x28x132xf32> to vector<2x28xf32>
    %31 = arith.addf %23, %30 : vector<2x28xf32>
    %c0_13 = arith.constant 0 : index
    %c4 = arith.constant 4 : index
    %c0_14 = arith.constant 0 : index
    %32 = vector.load %arg1[%c0_13, %c4, %c0_14] : memref<2x32x132xf32, #tpu.memory_space<vmem>>, vector<2x28x132xf32>
    %33 = vector.extract_strided_slice %0 {offsets = [4, 0], sizes = [1, 132], strides = [1, 1]} : vector<5x132xf32> to vector<1x132xf32>
    %34 = vector.shape_cast %33 : vector<1x132xf32> to vector<132xf32>
    %35 = vector.shape_cast %34 : vector<132xf32> to vector<1x1x132xf32>
    %36 = vector.broadcast %35 : vector<1x1x132xf32> to vector<2x28x132xf32>
    %37 = arith.mulf %32, %36 : vector<2x28x132xf32>
    %cst_15 = arith.constant dense<0.000000e+00> : vector<2x28xf32>
    %38 = vector.multi_reduction <add>, %37, %cst_15 [2] : vector<2x28x132xf32> to vector<2x28xf32>
    %39 = arith.addf %31, %38 : vector<2x28xf32>
    %cst_16 = arith.constant 0.000000e+00 : f32
    %40 = vector.broadcast %cst_16 : f32 to vector<2x100xf32>
    %c0_17 = arith.constant 0 : index
    %c28 = arith.constant 28 : index
    %41 = vector.load %arg3[%c0_17, %c28] : memref<2x128xf32, #tpu.memory_space<vmem>>, vector<2x100xf32>
    tpu.vector_store %arg3[%c0_17, %c28], %40 {strides = array<i32>} : memref<2x128xf32, #tpu.memory_space<vmem>>, vector<2x100xf32>,
    %c0_18 = arith.constant 0 : index
    %c0_19 = arith.constant 0 : index
    %42 = vector.load %arg3[%c0_18, %c0_19] : memref<2x128xf32, #tpu.memory_space<vmem>>, vector<2x28xf32>
    tpu.vector_store %arg3[%c0_18, %c0_19], %39 {strides = array<i32>} : memref<2x128xf32, #tpu.memory_space<vmem>>, vector<2x28xf32>,
    return
  }
  func.func @transform_0(%arg0: i32) -> (i32, i32, i32) {
    %c0_i32 = arith.constant 0 : i32
    %c0_i32_0 = arith.constant 0 : i32
    %c0_i32_1 = arith.constant 0 : i32
    return %arg0, %c0_i32, %c0_i32_0 : i32, i32, i32
  }
  func.func @transform_1(%arg0: i32) -> (i32, i32) {
    %c0_i32 = arith.constant 0 : i32
    %c0_i32_0 = arith.constant 0 : i32
    %c0_i32_1 = arith.constant 0 : i32
    return %c0_i32, %c0_i32_0 : i32, i32
  }
  func.func @transform_2(%arg0: i32) -> (i32, i32) {
    %c0_i32 = arith.constant 0 : i32
    %c0_i32_0 = arith.constant 0 : i32
    return %arg0, %c0_i32 : i32, i32
  }
}

</mosaic_0001>

<llo_original>
// kernel: tpu_custom_call.1
$region0: #{tpu_custom_call.1}
  #allocation0 [shape = 'u32[]', space=smem, size = 0x4, offset = 0x4, fixed_abs, tag = 'smem constant byte address 0x4 - core index']
  #allocation1 [shape = 'u32[144,128]{1,0:T(1,128)}', space=vmem, size = 0x12000, scoped, tag = 'internal scratch']
  %s0 = inlined_call_operand.hbm [shape: f32[2,32,132], index: 0, kind: input, shape index: {}]
  %s1 = inlined_call_operand.hbm [shape: f32[5,132], index: 1, kind: input, shape index: {}]
  %s2 = inlined_call_operand.hbm [shape: f32[2,128], index: 2, kind: output, shape index: {}]
  %s3 = sld [smem:[#allocation0]]
  $region26: #{tpu_custom_call.1} parent=0
    _
  %s5 = ssub.s32 1, %s3
  %s6 = scalar_select 0, %s5, %s3
  $region1: #{tpu_custom_call.1} parent=0
    #allocation2 [shape = 'u8[65536]{0}', space=vmem, size = 0x10000, scoped, tag = 'input window, operand 0, single buffered']
    #allocation3 [shape = 's32[1]{0}', space=sflag, size = 0x4, scoped, tag = 'scoped memory for tpu_custom_call.1']
    #allocation4 [shape = 's32[1]{0}', space=sflag, size = 0x4, scoped, tag = 'scoped memory for tpu_custom_call.1']
    #allocation5 [shape = 'u8[8192]{0}', space=vmem, size = 0x2000, scoped, tag = 'input window, operand 1, single buffered']
    #allocation6 [shape = 's32[1]{0}', space=sflag, size = 0x4, scoped, tag = 'scoped memory for tpu_custom_call.1']
    #allocation7 [shape = 'u8[1024]{0}', space=vmem, size = 0x400, scoped, tag = 'output window, operand 0, single buffered']
    %7 = vsyncpa [#allocation3], 0
    %8 = vsyncpa [#allocation6], 0
    %9 = vsyncpa [#allocation4], 0
    // Predicated region
    $region2: #{tpu_custom_call.1} parent=1 // pred_check
      _
    $region3: #{tpu_custom_call.1} parent=1 // pred_check_branch
      %11 = sbr.rel (0) target = $region5
    $region4: #{tpu_custom_call.1} parent=1 // pred_region
      %s13 = ssub.s32 2048, 2048
      %14 = vsyncadd [#allocation3], %s13
      %s15 = sshll.u32 [#allocation2], 4
      %s16 = int_to_ptr.vmem [resolvable:$true] %s15
      %21 = dma.hbm_to_vmem [thread:$0]  %s0, 2048, %s16, [#allocation3], 256, 256, 16
    $region5: #{tpu_custom_call.1} parent=1 // pred_fallthru
      _
    // Predicated region
    $region6: #{tpu_custom_call.1} parent=1 // pred_check
      _
    $region7: #{tpu_custom_call.1} parent=1 // pred_check_branch
      %23 = sbr.rel (0) target = $region9
    $region8: #{tpu_custom_call.1} parent=1 // pred_region
      %s25 = ssub.s32 256, 256
      %26 = vsyncadd [#allocation6], %s25
      %s28 = sshll.u32 [#allocation5], 4
      %s29 = int_to_ptr.vmem [resolvable:$true] %s28
      %31 = dma.hbm_to_vmem [thread:$0]  %s1, 256, %s29, [#allocation6]
    $region9: #{tpu_custom_call.1} parent=1 // pred_fallthru
      _
    // Predicated region
    $region10: #{tpu_custom_call.1} parent=1 // pred_check
      _
    $region11: #{tpu_custom_call.1} parent=1 // pred_check_branch
      %33 = sbr.rel (0) target = $region13
    $region12: #{tpu_custom_call.1} parent=1 // pred_region
      %34 = dma.done [#allocation3], 2048
    $region13: #{tpu_custom_call.1} parent=1 // pred_fallthru
      _
    // Predicated region
    $region14: #{tpu_custom_call.1} parent=1 // pred_check
      _
    $region15: #{tpu_custom_call.1} parent=1 // pred_check_branch
      %36 = sbr.rel (0) target = $region17
    $region16: #{tpu_custom_call.1} parent=1 // pred_region
      %37 = dma.done [#allocation6], 256
    $region17: #{tpu_custom_call.1} parent=1 // pred_fallthru
      _
    %v38 = vld [vmem:[#allocation5] sm:$0x1f]
    %v39 = vld [vmem:[#allocation5 + $0x8] sm:$0x1f]
    %v40 = vld [vmem:[#allocation2] sm:$0xff]
    %v41 = vld [vmem:[#allocation2 + $0x8] sm:$0xff]
    %v42 = vld [vmem:[#allocation2 + $0x10] sm:$0xff]
    %v43 = vld [vmem:[#allocation2 + $0x18] sm:$0xff]
    %v44 = vld [vmem:[#allocation2 + $0x20] sm:$0xff]
    %v45 = vld [vmem:[#allocation2 + $0x28] sm:$0xff]
    %v46 = vld [vmem:[#allocation2 + $0x30] sm:$0xf]
    %v47 = vld [vmem:[#allocation2 + $0x38] sm:$0xf]
    %v48 = vld [vmem:[#allocation2 + $0x40] sm:$0xff]
    %v49 = vld [vmem:[#allocation2 + $0x48] sm:$0xff]
    %v50 = vld [vmem:[#allocation2 + $0x50] sm:$0xff]
    %v51 = vld [vmem:[#allocation2 + $0x58] sm:$0xff]
    %v52 = vld [vmem:[#allocation2 + $0x60] sm:$0xff]
    %v53 = vld [vmem:[#allocation2 + $0x68] sm:$0xff]
    %v54 = vld [vmem:[#allocation2 + $0x70] sm:$0xf]
    %v55 = vld [vmem:[#allocation2 + $0x78] sm:$0xf]
    %v56 = vlaneseq
    %v57 = vshrl.u32 %v56, 7
    %v58 = vsub.s32 0, %v57
    %v59 = vrot.slane %v38, %v58
    %v60 = vlaneseq
    %v61 = vshrl.u32 %v60, 7
    %v62 = vsub.s32 0, %v61
    %v63 = vrot.slane %v39, %v62
    %v64 = vmul.f32 %v40, %v59
    %v65 = vmul.f32 %v41, %v63
    %v66 = vmul.f32 %v42, %v59
    %v67 = vmul.f32 %v43, %v63
    %v68 = vmul.f32 %v44, %v59
    %v69 = vmul.f32 %v45, %v63
    %v70 = vmul.f32 %v46, %v59
    %v71 = vmul.f32 %v47, %v63
    %v72 = vmul.f32 %v48, %v59
    %v73 = vmul.f32 %v49, %v63
    %v74 = vmul.f32 %v50, %v59
    %v75 = vmul.f32 %v51, %v63
    %v76 = vmul.f32 %v52, %v59
    %v77 = vmul.f32 %v53, %v63
    %v78 = vmul.f32 %v54, %v59
    %v79 = vmul.f32 %v55, %v63
    %vm80 = vcmask 31744
    %v81 = vsel %vm80, %v65, 0.0
    %v82 = vadd.f32 %v64, %v81
    %83 = vadd.xlane.f32.xlu0 %v82
    %v84 = vpop.xlane.xlu0 %83
    %v85 = vsel %vm80, %v67, 0.0
    %v86 = vadd.f32 %v66, %v85
    %87 = vadd.xlane.f32.xlu0 %v86
    %v88 = vpop.xlane.xlu0 %87
    %v89 = vsel %vm80, %v69, 0.0
    %v90 = vadd.f32 %v68, %v89
    %91 = vadd.xlane.f32.xlu0 %v90
    %v92 = vpop.xlane.xlu0 %91
    %vm93 = vcmask 1043456
    %v94 = vsel %vm93, %v70, 0.0
    %vm95 = vcmask 27648
    %v96 = vsel %vm95, %v71, 0.0
    %v97 = vadd.f32 %v94, %v96
    %98 = vadd.xlane.f32.xlu0 %v97
    %v99 = vpop.xlane.xlu0 %98
    %v100 = vsel %vm80, %v73, 0.0
    %v101 = vadd.f32 %v72, %v100
    %102 = vadd.xlane.f32.xlu0 %v101
    %v103 = vpop.xlane.xlu0 %102
    %v104 = vsel %vm80, %v75, 0.0
    %v105 = vadd.f32 %v74, %v104
    %106 = vadd.xlane.f32.xlu0 %v105
    %v107 = vpop.xlane.xlu0 %106
    %v108 = vsel %vm80, %v77, 0.0
    %v109 = vadd.f32 %v76, %v108
    %110 = vadd.xlane.f32.xlu0 %v109
    %v111 = vpop.xlane.xlu0 %110
    %v112 = vsel %vm93, %v78, 0.0
    %v113 = vsel %vm95, %v79, 0.0
    %v114 = vadd.f32 %v112, %v113
    %115 = vadd.xlane.f32.xlu0 %v114
    %v116 = vpop.xlane.xlu0 %115
    %v117 = vld [vmem:[#allocation2] sm:$0xfe]
    %v118 = vld [vmem:[#allocation2 + $0x8] sm:$0xfe]
    %v119 = vld [vmem:[#allocation2 + $0x30] sm:$0x1f]
    %v120 = vld [vmem:[#allocation2 + $0x38] sm:$0x1f]
    %v121 = vld [vmem:[#allocation2 + $0x40] sm:$0xfe]
    %v122 = vld [vmem:[#allocation2 + $0x48] sm:$0xfe]
    %v123 = vld [vmem:[#allocation2 + $0x70] sm:$0x1f]
    %v124 = vld [vmem:[#allocation2 + $0x78] sm:$0x1f]
    %v125 = vlaneseq
    %v126 = vshrl.u32 %v125, 7
    %v127 = vsub.s32 1, %v126
    %v128 = vrot.slane %v38, %v127
    %v129 = vlaneseq
    %v130 = vshrl.u32 %v129, 7
    %v131 = vsub.s32 1, %v130
    %v132 = vrot.slane %v39, %v131
    %v133 = vmul.f32 %v117, %v128
    %v134 = vmul.f32 %v118, %v132
    %v135 = vmul.f32 %v42, %v128
    %v136 = vmul.f32 %v43, %v132
    %v137 = vmul.f32 %v44, %v128
    %v138 = vmul.f32 %v45, %v132
    %v139 = vmul.f32 %v119, %v128
    %v140 = vmul.f32 %v120, %v132
    %v141 = vmul.f32 %v121, %v128
    %v142 = vmul.f32 %v122, %v132
    %v143 = vmul.f32 %v50, %v128
    %v144 = vmul.f32 %v51, %v132
    %v145 = vmul.f32 %v52, %v128
    %v146 = vmul.f32 %v53, %v132
    %v147 = vmul.f32 %v123, %v128
    %v148 = vmul.f32 %v124, %v132
    %vm149 = vcmask 1047553
    %v150 = vsel %vm149, %v133, 0.0
    %vm151 = vcmask 31745
    %v152 = vsel %vm151, %v134, 0.0
    %v153 = vadd.f32 %v150, %v152
    %154 = vadd.xlane.f32.xlu0 %v153
    %v155 = vpop.xlane.xlu0 %154
    %v156 = vsel %vm80, %v136, 0.0
    %v157 = vadd.f32 %v135, %v156
    %158 = vadd.xlane.f32.xlu0 %v157
    %v159 = vpop.xlane.xlu0 %158
    %v160 = vsel %vm80, %v138, 0.0
    %v161 = vadd.f32 %v137, %v160
    %162 = vadd.xlane.f32.xlu0 %v161
    %v163 = vpop.xlane.xlu0 %162
    %vm164 = vcmask 1044480
    %v165 = vsel %vm164, %v139, 0.0
    %vm166 = vcmask 28672
    %v167 = vsel %vm166, %v140, 0.0
    %v168 = vadd.f32 %v165, %v167
    %169 = vadd.xlane.f32.xlu0 %v168
    %v170 = vpop.xlane.xlu0 %169
    %v171 = vsel %vm149, %v141, 0.0
    %v172 = vsel %vm151, %v142, 0.0
    %v173 = vadd.f32 %v171, %v172
    %174 = vadd.xlane.f32.xlu0 %v173
    %v175 = vpop.xlane.xlu0 %174
    %v176 = vsel %vm80, %v144, 0.0
    %v177 = vadd.f32 %v143, %v176
    %178 = vadd.xlane.f32.xlu0 %v177
    %v179 = vpop.xlane.xlu0 %178
    %v180 = vsel %vm80, %v146, 0.0
    %v181 = vadd.f32 %v145, %v180
    %182 = vadd.xlane.f32.xlu0 %v181
    %v183 = vpop.xlane.xlu0 %182
    %v184 = vsel %vm164, %v147, 0.0
    %v185 = vsel %vm166, %v148, 0.0
    %v186 = vadd.f32 %v184, %v185
    %187 = vadd.xlane.f32.xlu0 %v186
    %v188 = vpop.xlane.xlu0 %187
    %vm197 = vcmask 1046528
    %v198 = vrot.slane %v155, 1
    %v199 = vrot.slane %v159, 1
    %v200 = vsel %vm197, %v198, %v199
    %v201 = vrot.slane %v163, 1
    %v202 = vsel %vm197, %v199, %v201
    %v203 = vrot.slane %v170, 1
    %v204 = vsel %vm197, %v201, %v203
    %v205 = vrot.slane %v175, 1
    %v206 = vrot.slane %v179, 1
    %v207 = vsel %vm197, %v205, %v206
    %v208 = vrot.slane %v183, 1
    %v209 = vsel %vm197, %v206, %v208
    %v210 = vrot.slane %v188, 1
    %v211 = vsel %vm197, %v208, %v210
    %v220 = vadd.f32 %v84, %v200
    %v221 = vadd.f32 %v88, %v202
    %v222 = vadd.f32 %v92, %v204
    %v223 = vadd.f32 %v99, %v203
    %v224 = vadd.f32 %v103, %v207
    %v225 = vadd.f32 %v107, %v209
    %v226 = vadd.f32 %v111, %v211
    %v227 = vadd.f32 %v116, %v210
    %v228 = vld [vmem:[#allocation2] sm:$0xfc]
    %v229 = vld [vmem:[#allocation2 + $0x8] sm:$0xfc]
    %v230 = vld [vmem:[#allocation2 + $0x30] sm:$0x3f]
    %v231 = vld [vmem:[#allocation2 + $0x38] sm:$0x3f]
    %v232 = vld [vmem:[#allocation2 + $0x40] sm:$0xfc]
    %v233 = vld [vmem:[#allocation2 + $0x48] sm:$0xfc]
    %v234 = vld [vmem:[#allocation2 + $0x70] sm:$0x3f]
    %v235 = vld [vmem:[#allocation2 + $0x78] sm:$0x3f]
    %v236 = vlaneseq
    %v237 = vshrl.u32 %v236, 7
    %v238 = vsub.s32 2, %v237
    %v239 = vrot.slane %v38, %v238
    %v240 = vlaneseq
    %v241 = vshrl.u32 %v240, 7
    %v242 = vsub.s32 2, %v241
    %v243 = vrot.slane %v39, %v242
    %v244 = vmul.f32 %v228, %v239
    %v245 = vmul.f32 %v229, %v243
    %v246 = vmul.f32 %v42, %v239
    %v247 = vmul.f32 %v43, %v243
    %v248 = vmul.f32 %v44, %v239
    %v249 = vmul.f32 %v45, %v243
    %v250 = vmul.f32 %v230, %v239
    %v251 = vmul.f32 %v231, %v243
    %v252 = vmul.f32 %v232, %v239
    %v253 = vmul.f32 %v233, %v243
    %v254 = vmul.f32 %v50, %v239
    %v255 = vmul.f32 %v51, %v243
    %v256 = vmul.f32 %v52, %v239
    %v257 = vmul.f32 %v53, %v243
    %v258 = vmul.f32 %v234, %v239
    %v259 = vmul.f32 %v235, %v243
    %vm260 = vcmask 1047554
    %v261 = vsel %vm260, %v244, 0.0
    %vm262 = vcmask 31746
    %v263 = vsel %vm262, %v245, 0.0
    %v264 = vadd.f32 %v261, %v263
    %265 = vadd.xlane.f32.xlu0 %v264
    %v266 = vpop.xlane.xlu0 %265
    %v267 = vsel %vm80, %v247, 0.0
    %v268 = vadd.f32 %v246, %v267
    %269 = vadd.xlane.f32.xlu0 %v268
    %v270 = vpop.xlane.xlu0 %269
    %v271 = vsel %vm80, %v249, 0.0
    %v272 = vadd.f32 %v248, %v271
    %273 = vadd.xlane.f32.xlu0 %v272
    %v274 = vpop.xlane.xlu0 %273
    %vm275 = vcmask 1045504
    %v276 = vsel %vm275, %v250, 0.0
    %vm277 = vcmask 29696
    %v278 = vsel %vm277, %v251, 0.0
    %v279 = vadd.f32 %v276, %v278
    %280 = vadd.xlane.f32.xlu0 %v279
    %v281 = vpop.xlane.xlu0 %280
    %v282 = vsel %vm260, %v252, 0.0
    %v283 = vsel %vm262, %v253, 0.0
    %v284 = vadd.f32 %v282, %v283
    %285 = vadd.xlane.f32.xlu0 %v284
    %v286 = vpop.xlane.xlu0 %285
    %v287 = vsel %vm80, %v255, 0.0
    %v288 = vadd.f32 %v254, %v287
    %289 = vadd.xlane.f32.xlu0 %v288
    %v290 = vpop.xlane.xlu0 %289
    %v291 = vsel %vm80, %v257, 0.0
    %v292 = vadd.f32 %v256, %v291
    %293 = vadd.xlane.f32.xlu0 %v292
    %v294 = vpop.xlane.xlu0 %293
    %v295 = vsel %vm275, %v258, 0.0
    %v296 = vsel %vm277, %v259, 0.0
    %v297 = vadd.f32 %v295, %v296
    %298 = vadd.xlane.f32.xlu0 %v297
    %v299 = vpop.xlane.xlu0 %298
    %v308 = vrot.slane %v266, 2
    %v309 = vrot.slane %v270, 2
    %v310 = vsel %vm275, %v308, %v309
    %v311 = vrot.slane %v274, 2
    %v312 = vsel %vm275, %v309, %v311
    %v313 = vrot.slane %v281, 2
    %v314 = vsel %vm275, %v311, %v313
    %v315 = vrot.slane %v286, 2
    %v316 = vrot.slane %v290, 2
    %v317 = vsel %vm275, %v315, %v316
    %v318 = vrot.slane %v294, 2
    %v319 = vsel %vm275, %v316, %v318
    %v320 = vrot.slane %v299, 2
    %v321 = vsel %vm275, %v318, %v320
    %v330 = vadd.f32 %v220, %v310
    %v331 = vadd.f32 %v221, %v312
    %v332 = vadd.f32 %v222, %v314
    %v333 = vadd.f32 %v223, %v313
    %v334 = vadd.f32 %v224, %v317
    %v335 = vadd.f32 %v225, %v319
    %v336 = vadd.f32 %v226, %v321
    %v337 = vadd.f32 %v227, %v320
    %v338 = vld [vmem:[#allocation2] sm:$0xf8]
    %v339 = vld [vmem:[#allocation2 + $0x8] sm:$0xf8]
    %v340 = vld [vmem:[#allocation2 + $0x30] sm:$0x7f]
    %v341 = vld [vmem:[#allocation2 + $0x38] sm:$0x7f]
    %v342 = vld [vmem:[#allocation2 + $0x40] sm:$0xf8]
    %v343 = vld [vmem:[#allocation2 + $0x48] sm:$0xf8]
    %v344 = vld [vmem:[#allocation2 + $0x70] sm:$0x7f]
    %v345 = vld [vmem:[#allocation2 + $0x78] sm:$0x7f]
    %v346 = vlaneseq
    %v347 = vshrl.u32 %v346, 7
    %v348 = vsub.s32 3, %v347
    %v349 = vrot.slane %v38, %v348
    %v350 = vlaneseq
    %v351 = vshrl.u32 %v350, 7
    %v352 = vsub.s32 3, %v351
    %v353 = vrot.slane %v39, %v352
    %v354 = vmul.f32 %v338, %v349
    %v355 = vmul.f32 %v339, %v353
    %v356 = vmul.f32 %v42, %v349
    %v357 = vmul.f32 %v43, %v353
    %v358 = vmul.f32 %v44, %v349
    %v359 = vmul.f32 %v45, %v353
    %v360 = vmul.f32 %v340, %v349
    %v361 = vmul.f32 %v341, %v353
    %v362 = vmul.f32 %v342, %v349
    %v363 = vmul.f32 %v343, %v353
    %v364 = vmul.f32 %v50, %v349
    %v365 = vmul.f32 %v51, %v353
    %v366 = vmul.f32 %v52, %v349
    %v367 = vmul.f32 %v53, %v353
    %v368 = vmul.f32 %v344, %v349
    %v369 = vmul.f32 %v345, %v353
    %vm370 = vcmask 1047555
    %v371 = vsel %vm370, %v354, 0.0
    %vm372 = vcmask 31747
    %v373 = vsel %vm372, %v355, 0.0
    %v374 = vadd.f32 %v371, %v373
    %375 = vadd.xlane.f32.xlu0 %v374
    %v376 = vpop.xlane.xlu0 %375
    %v377 = vsel %vm80, %v357, 0.0
    %v378 = vadd.f32 %v356, %v377
    %379 = vadd.xlane.f32.xlu0 %v378
    %v380 = vpop.xlane.xlu0 %379
    %v381 = vsel %vm80, %v359, 0.0
    %v382 = vadd.f32 %v358, %v381
    %383 = vadd.xlane.f32.xlu0 %v382
    %v384 = vpop.xlane.xlu0 %383
    %v385 = vsel %vm197, %v360, 0.0
    %vm386 = vcmask 30720
    %v387 = vsel %vm386, %v361, 0.0
    %v388 = vadd.f32 %v385, %v387
    %389 = vadd.xlane.f32.xlu0 %v388
    %v390 = vpop.xlane.xlu0 %389
    %v391 = vsel %vm370, %v362, 0.0
    %v392 = vsel %vm372, %v363, 0.0
    %v393 = vadd.f32 %v391, %v392
    %394 = vadd.xlane.f32.xlu0 %v393
    %v395 = vpop.xlane.xlu0 %394
    %v396 = vsel %vm80, %v365, 0.0
    %v397 = vadd.f32 %v364, %v396
    %398 = vadd.xlane.f32.xlu0 %v397
    %v399 = vpop.xlane.xlu0 %398
    %v400 = vsel %vm80, %v367, 0.0
    %v401 = vadd.f32 %v366, %v400
    %402 = vadd.xlane.f32.xlu0 %v401
    %v403 = vpop.xlane.xlu0 %402
    %v404 = vsel %vm197, %v368, 0.0
    %v405 = vsel %vm386, %v369, 0.0
    %v406 = vadd.f32 %v404, %v405
    %407 = vadd.xlane.f32.xlu0 %v406
    %v408 = vpop.xlane.xlu0 %407
    %v417 = vrot.slane %v376, 3
    %v418 = vrot.slane %v380, 3
    %v419 = vsel %vm164, %v417, %v418
    %v420 = vrot.slane %v384, 3
    %v421 = vsel %vm164, %v418, %v420
    %v422 = vrot.slane %v390, 3
    %v423 = vsel %vm164, %v420, %v422
    %v424 = vrot.slane %v395, 3
    %v425 = vrot.slane %v399, 3
    %v426 = vsel %vm164, %v424, %v425
    %v427 = vrot.slane %v403, 3
    %v428 = vsel %vm164, %v425, %v427
    %v429 = vrot.slane %v408, 3
    %v430 = vsel %vm164, %v427, %v429
    %v439 = vadd.f32 %v330, %v419
    %v440 = vadd.f32 %v331, %v421
    %v441 = vadd.f32 %v332, %v423
    %v442 = vadd.f32 %v333, %v422
    %v443 = vadd.f32 %v334, %v426
    %v444 = vadd.f32 %v335, %v428
    %v445 = vadd.f32 %v336, %v430
    %v446 = vadd.f32 %v337, %v429
    %v447 = vld [vmem:[#allocation2] sm:$0xf0]
    %v448 = vld [vmem:[#allocation2 + $0x8] sm:$0xf0]
    %v449 = vld [vmem:[#allocation2 + $0x30] sm:$0xff]
    %v450 = vld [vmem:[#allocation2 + $0x38] sm:$0xff]
    %v451 = vld [vmem:[#allocation2 + $0x40] sm:$0xf0]
    %v452 = vld [vmem:[#allocation2 + $0x48] sm:$0xf0]
    %v453 = vld [vmem:[#allocation2 + $0x70] sm:$0xff]
    %v454 = vld [vmem:[#allocation2 + $0x78] sm:$0xff]
    %v455 = vlaneseq
    %v456 = vshrl.u32 %v455, 7
    %v457 = vsub.s32 4, %v456
    %v458 = vrot.slane %v38, %v457
    %v459 = vlaneseq
    %v460 = vshrl.u32 %v459, 7
    %v461 = vsub.s32 4, %v460
    %v462 = vrot.slane %v39, %v461
    %v463 = vmul.f32 %v447, %v458
    %v464 = vmul.f32 %v448, %v462
    %v465 = vmul.f32 %v42, %v458
    %v466 = vmul.f32 %v43, %v462
    %v467 = vmul.f32 %v44, %v458
    %v468 = vmul.f32 %v45, %v462
    %v469 = vmul.f32 %v449, %v458
    %v470 = vmul.f32 %v450, %v462
    %v471 = vmul.f32 %v451, %v458
    %v472 = vmul.f32 %v452, %v462
    %v473 = vmul.f32 %v50, %v458
    %v474 = vmul.f32 %v51, %v462
    %v475 = vmul.f32 %v52, %v458
    %v476 = vmul.f32 %v53, %v462
    %v477 = vmul.f32 %v453, %v458
    %v478 = vmul.f32 %v454, %v462
    %vm479 = vcmask 1047556
    %v480 = vsel %vm479, %v463, 0.0
    %vm481 = vcmask 31748
    %v482 = vsel %vm481, %v464, 0.0
    %v483 = vadd.f32 %v480, %v482
    %484 = vadd.xlane.f32.xlu0 %v483
    %v485 = vpop.xlane.xlu0 %484
    %v486 = vsel %vm80, %v466, 0.0
    %v487 = vadd.f32 %v465, %v486
    %488 = vadd.xlane.f32.xlu0 %v487
    %v489 = vpop.xlane.xlu0 %488
    %v490 = vsel %vm80, %v468, 0.0
    %v491 = vadd.f32 %v467, %v490
    %492 = vadd.xlane.f32.xlu0 %v491
    %v493 = vpop.xlane.xlu0 %492
    %v494 = vsel %vm80, %v470, 0.0
    %v495 = vadd.f32 %v469, %v494
    %496 = vadd.xlane.f32.xlu0 %v495
    %v497 = vpop.xlane.xlu0 %496
    %v498 = vsel %vm479, %v471, 0.0
    %v499 = vsel %vm481, %v472, 0.0
    %v500 = vadd.f32 %v498, %v499
    %501 = vadd.xlane.f32.xlu0 %v500
    %v502 = vpop.xlane.xlu0 %501
    %v503 = vsel %vm80, %v474, 0.0
    %v504 = vadd.f32 %v473, %v503
    %505 = vadd.xlane.f32.xlu0 %v504
    %v506 = vpop.xlane.xlu0 %505
    %v507 = vsel %vm80, %v476, 0.0
    %v508 = vadd.f32 %v475, %v507
    %509 = vadd.xlane.f32.xlu0 %v508
    %v510 = vpop.xlane.xlu0 %509
    %v511 = vsel %vm80, %v478, 0.0
    %v512 = vadd.f32 %v477, %v511
    %513 = vadd.xlane.f32.xlu0 %v512
    %v514 = vpop.xlane.xlu0 %513
    %v523 = vrot.slane %v485, 4
    %v524 = vrot.slane %v489, 4
    %v525 = vsel %vm93, %v523, %v524
    %v526 = vrot.slane %v493, 4
    %v527 = vsel %vm93, %v524, %v526
    %v528 = vrot.slane %v497, 4
    %v529 = vsel %vm93, %v526, %v528
    %v530 = vrot.slane %v502, 4
    %v531 = vrot.slane %v506, 4
    %v532 = vsel %vm93, %v530, %v531
    %v533 = vrot.slane %v510, 4
    %v534 = vsel %vm93, %v531, %v533
    %v535 = vrot.slane %v514, 4
    %v536 = vsel %vm93, %v533, %v535
    %v545 = vadd.f32 %v439, %v525
    %v546 = vadd.f32 %v440, %v527
    %v547 = vadd.f32 %v441, %v529
    %v548 = vadd.f32 %v442, %v528
    %v549 = vadd.f32 %v443, %v532
    %v550 = vadd.f32 %v444, %v534
    %v551 = vadd.f32 %v445, %v536
    %v552 = vadd.f32 %v446, %v535
    %vm553 = vcmask 1041632
    %554 = vst.msk [vmem:[#allocation7] sm:$0x3] %vm553, 0.0
    %563 = vset.pattern.permute.xlu0 0
    %564 = vperm.xlu0 %563, %v545
    %v565 = vpop.permute.xlu0 %564
    %566 = vset.pattern.permute.xlu0 0
    %567 = vperm.xlu0 %566, %v546
    %v568 = vpop.permute.xlu0 %567
    %569 = vset.pattern.permute.xlu0 0
    %570 = vperm.xlu0 %569, %v547
    %v571 = vpop.permute.xlu0 %570
    %572 = vset.pattern.permute.xlu0 0
    %573 = vperm.xlu0 %572, %v548
    %v574 = vpop.permute.xlu0 %573
    %575 = vset.pattern.permute.xlu0 0
    %576 = vperm.xlu0 %575, %v549
    %v577 = vpop.permute.xlu0 %576
    %578 = vset.pattern.permute.xlu0 0
    %579 = vperm.xlu0 %578, %v550
    %v580 = vpop.permute.xlu0 %579
    %581 = vset.pattern.permute.xlu0 0
    %582 = vperm.xlu0 %581, %v551
    %v583 = vpop.permute.xlu0 %582
    %584 = vset.pattern.permute.xlu0 0
    %585 = vperm.xlu0 %584, %v552
    %v586 = vpop.permute.xlu0 %585
    %v587 = vlaneseq
    %v588 = vand.u32 %v587, 127
    %v589 = vlaneseq
    %v590 = vshrl.u32 %v589, 7
    %v591 = vsub.s32 %v588, %v590
    %v592 = vrot.slane %v565, %v591
    %v593 = vadd.s32 %v588, 4294967288
    %v594 = vlaneseq
    %v595 = vshrl.u32 %v594, 7
    %v596 = vsub.s32 %v593, %v595
    %v597 = vrot.slane %v568, %v596
    %vm598 = vcmask 130112
    %v599 = vsel %vm598, %v597, %v592
    %v600 = vadd.s32 %v588, 4294967280
    %v601 = vlaneseq
    %v602 = vshrl.u32 %v601, 7
    %v603 = vsub.s32 %v600, %v602
    %v604 = vrot.slane %v571, %v603
    %vm605 = vcmask 195712
    %v606 = vsel %vm605, %v604, %v599
    %v607 = vadd.s32 %v588, 4294967272
    %v608 = vlaneseq
    %v609 = vshrl.u32 %v608, 7
    %v610 = vsub.s32 %v607, %v609
    %v611 = vrot.slane %v574, %v610
    %vm612 = vcmask 261312
    %v613 = vsel %vm612, %v611, %v606
    %v614 = vlaneseq
    %v615 = vshrl.u32 %v614, 7
    %v616 = vsub.s32 %v588, %v615
    %v617 = vrot.slane %v577, %v616
    %v618 = vlaneseq
    %v619 = vshrl.u32 %v618, 7
    %v620 = vsub.s32 %v593, %v619
    %v621 = vrot.slane %v580, %v620
    %v622 = vsel %vm598, %v621, %v617
    %v623 = vlaneseq
    %v624 = vshrl.u32 %v623, 7
    %v625 = vsub.s32 %v600, %v624
    %v626 = vrot.slane %v583, %v625
    %v627 = vsel %vm605, %v626, %v622
    %v628 = vlaneseq
    %v629 = vshrl.u32 %v628, 7
    %v630 = vsub.s32 %v607, %v629
    %v631 = vrot.slane %v586, %v630
    %v632 = vsel %vm612, %v631, %v627
    %vm633 = vcmask 1041409
    %v634 = vsel %vm633, %v632, %v613
    %vm636 = vcmask 222208
    %637 = vst.msk [vmem:[#allocation7] sm:$0x3] %vm636, %v634
    // Predicated region
    $region18: #{tpu_custom_call.1} parent=1 // pred_check
      _
    $region19: #{tpu_custom_call.1} parent=1 // pred_check_branch
      %639 = sbr.rel (0) target = $region21
    $region20: #{tpu_custom_call.1} parent=1 // pred_region
      %s641 = ssub.s32 32, 32
      %642 = vsyncadd [#allocation4], %s641
      %s644 = sshll.u32 [#allocation7], 4
      %s645 = int_to_ptr.vmem [resolvable:$true] %s644
      %647 = dma.vmem_to_hbm [thread:$0]  %s645, 32, %s2, [#allocation4]
    $region21: #{tpu_custom_call.1} parent=1 // pred_fallthru
      _
    // Predicated region
    $region22: #{tpu_custom_call.1} parent=1 // pred_check
      _
    $region23: #{tpu_custom_call.1} parent=1 // pred_check_branch
      %649 = sbr.rel (0) target = $region25
    $region24: #{tpu_custom_call.1} parent=1 // pred_region
      %650 = dma.done [#allocation4], 32
    $region25: #{tpu_custom_call.1} parent=1 // pred_fallthru
      _
    %651 = vsyncpa [#allocation3], 1
    %652 = vsyncpa [#allocation6], 1
    %653 = vsyncpa [#allocation4], 1

</llo_original>
